<compile_context>
chip_gen: v6e
topology: v6e:2x2x1
jax: 0.10.0
libtpu: 0.0.40
codegen_flags: <defaults>
</compile_context>

<pallas_src>
import functools

import jax
import jax.numpy as jnp
from jax import lax
from jax.experimental import pallas as pl
from jax.experimental.pallas import tpu as pltpu


DEFAULT_TOKEN_BLOCK = 256       # 128 is plenty on v5e; 256 good for v6e/v7x
DEFAULT_GATHER_THRESHOLD = 1024  # vocab above this -> DMA-gather path


def _round_up(x, m):
    return (x + m - 1) // m * m


# --------------------------------------------------------------------------
# Path A: small vocab — one-hot @ table on the MXU (table resident in VMEM)
# --------------------------------------------------------------------------
def _onehot_kernel(ids_ref, emb_ref, out_ref):
    """ids_ref: (tb, 1) int32; emb_ref: (v_pad, n_d) f32; out_ref: (tb, n_d)."""
    ids = ids_ref[...]                                     # (tb, 1)
    tb = ids.shape[0]
    v_pad = emb_ref.shape[0]
    vocab_iota = lax.broadcasted_iota(jnp.int32, (tb, v_pad), 1)
    one_hot = (ids == vocab_iota).astype(emb_ref.dtype)    # (tb, v_pad)
    out_ref[...] = jnp.dot(
        one_hot, emb_ref[...], preferred_element_type=jnp.float32
    ).astype(out_ref.dtype)


def _onehot_lookup(flat_ids, table, n_pad, tb, n_d):
    v_pad = table.shape[0]
    ids2d = flat_ids.reshape(n_pad, 1)

    # Raise the scoped VMEM limit only when the resident table actually needs
    # it (v5e default scoped limit is 16 MiB, v6e/v7x 32 MiB).
    table_bytes = v_pad * n_d * 4
    est = 2 * (table_bytes + tb * 4 + tb * n_d * 4) + tb * v_pad * 4 + (2 << 20)
    vmem_limit = int(min(est, 96 * 1024 * 1024)) if est > (16 << 20) else None

    return pl.pallas_call(
        _onehot_kernel,
        out_shape=jax.ShapeDtypeStruct((n_pad, n_d), table.dtype),
        grid=(n_pad // tb,),
        in_specs=[
            pl.BlockSpec((tb, 1), lambda i: (i, 0)),        # token ids
            pl.BlockSpec((v_pad, n_d), lambda i: (0, 0)),   # full table (fetched once)
        ],
        out_specs=pl.BlockSpec((tb, n_d), lambda i: (i, 0)),
        compiler_params=pltpu.CompilerParams(
            dimension_semantics=("parallel",),
            vmem_limit_bytes=vmem_limit,
        ),
    )(ids2d, table)


# --------------------------------------------------------------------------
# Path B: large vocab — scalar-prefetched ids drive a per-row DMA gather
# --------------------------------------------------------------------------
def _gather_kernel(ids_ref, table_hbm, out_ref, buf, sem):
    """ids_ref: SMEM (n_pad,) int32 (scalar prefetch)
    table_hbm: HBM (vocab, n_d) ref (memory_space=pl.ANY)
    out_ref  : VMEM (tb, n_d)
    buf      : VMEM (tb, n_d) scratch
    sem      : DMA semaphore
    """
    tb = out_ref.shape[0]
    base = pl.program_id(0) * tb

    # Issue one row-DMA per token in this block.
    @pl.loop(0, tb)
    def _issue(i):
        row = ids_ref[base + i]
        pltpu.make_async_copy(
            table_hbm.at[pl.ds(row, 1), :],
            buf.at[pl.ds(i, 1), :],
            sem,
        ).start()

    # Drain: wait once per issued copy (all copies are the same size).
    @pl.loop(0, tb)
    def _drain(i):
        pltpu.make_async_copy(
            table_hbm.at[pl.ds(0, 1), :],
            buf.at[pl.ds(0, 1), :],
            sem,
        ).wait()

    out_ref[...] = buf[...]


def _gather_lookup(flat_ids, table, n_pad, tb, n_d):
    grid_spec = pltpu.PrefetchScalarGridSpec(
        num_scalar_prefetch=1,
        grid=(n_pad // tb,),
        in_specs=[pl.BlockSpec(memory_space=pl.ANY)],       # table stays in HBM
        out_specs=pl.BlockSpec((tb, n_d), lambda i, ids: (i, 0)),
        scratch_shapes=[
            pltpu.VMEM((tb, n_d), table.dtype),
            pltpu.SemaphoreType.DMA,
        ],
    )
    return pl.pallas_call(
        _gather_kernel,
        out_shape=jax.ShapeDtypeStruct((n_pad, n_d), table.dtype),
        grid_spec=grid_spec,
        compiler_params=pltpu.CompilerParams(
            dimension_semantics=("parallel",),
        ),
    )(flat_ids, table)


# --------------------------------------------------------------------------
# Public wrapper
# --------------------------------------------------------------------------
@functools.partial(
    jax.jit,
    static_argnames=("token_block", "gather_threshold", "force_gather"),
)
def embedding_lookup(ids, table, *, token_block=DEFAULT_TOKEN_BLOCK,
                     gather_threshold=DEFAULT_GATHER_THRESHOLD,
                     force_gather=False):
    """Pallas equivalent of `nn.Embedding(vocab, n_d)(ids)`.

    ids:   integer array of any shape
    table: (vocab, n_d) float32 embedding weight (vocab may be pre-padded to x8)
    returns float32 array of shape ids.shape + (n_d,)
    """
    orig_shape = ids.shape
    flat = ids.reshape(-1).astype(jnp.int32)
    n_orig = flat.shape[0]
    n = max(n_orig, 1)
    vocab, n_d = table.shape

    # Token block: large for MXU/pipeline efficiency, capped to the actual
    # token count so toy inputs don't over-pad.  Always a multiple of 8.
    tb = min(_round_up(max(token_block, 8), 8), _round_up(n, 8))
    n_pad = _round_up(n, tb)

    # Clamp ids defensively (nn.Embedding would error on OOB ids; we clamp so
    # the DMA-gather path never issues an out-of-bounds HBM read).
    flat = jnp.clip(flat, 0, vocab - 1)
    flat_p = jnp.pad(flat, (0, n_pad - n_orig))

    use_gather = force_gather or vocab > gather_threshold
    if use_gather:
        out = _gather_lookup(flat_p, table, n_pad, tb, n_d)
    else:
        # Pad vocab to a multiple of 8 for the VMEM-resident table.  This is a
        # static no-op when the caller (EmbeddingLayer) pre-padded at init.
        v_pad = _round_up(vocab, 8)
        if v_pad != vocab:
            table = jnp.pad(table, ((0, v_pad - vocab), (0, 0)))
        out = _onehot_lookup(flat_p, table, n_pad, tb, n_d)

    return out[:n_orig].reshape(*orig_shape, n_d)


class EmbeddingLayer:
    """JAX/Pallas port of the PyTorch EmbeddingLayer (forward pass)."""

    GATHER_THRESHOLD = DEFAULT_GATHER_THRESHOLD

    def __init__(self, n_d, words, key, fix_emb=False):
        word2id = {}
        for w in words:
            if w not in word2id:
                word2id[w] = len(word2id)
        self.word2id = word2id
        self.n_V, self.n_d = len(word2id), n_d
        # nn.Embedding default init: weight ~ N(0, 1)
        self.weight = jax.random.normal(key, (self.n_V, n_d), dtype=jnp.float32)

        # Hoisted one-time vocab padding for the small-vocab (one-hot) path so
        # the per-call jitted path never re-pads the table.  The large-vocab
        # DMA-gather path needs no padding at all.
        if self.n_V <= self.GATHER_THRESHOLD and self.n_V % 8 != 0:
            v_pad = _round_up(self.n_V, 8)
            self._table = jnp.pad(self.weight, ((0, v_pad - self.n_V), (0, 0)))
        else:
            self._table = self.weight
        # TODO(synk): fix_emb only freezes the weight during training; it has
        # no effect on the forward pass implemented here.

    def forward(self, x):
        return embedding_lookup(x, self._table,
                                gather_threshold=self.GATHER_THRESHOLD)

    def map_to_ids(self, text):
        return jnp.asarray([self.word2id[w] for w in text], dtype=jnp.int32)


if __name__ == "__main__":
    key = jax.random.PRNGKey(0)
    k_emb, k_idx = jax.random.split(key)

    words = ["<pad>", "<unk>", "the", "quick", "brown", "fox",
             "jumps", "over", "lazy", "dog", "."]
    n_d = 32
    layer = EmbeddingLayer(n_d, words, k_emb)

    # batch=2, seq=8 token-id tensor
    x = jax.random.randint(k_idx, (2, 8), 0, layer.n_V, dtype=jnp.int32)

    ref = jnp.take(layer.weight, x, axis=0)

    # Path A (small vocab, one-hot MXU gather) — what the module uses.
    out = jax.block_until_ready(layer.forward(x))
    assert out.shape == (2, 8, n_d), out.shape
    assert jnp.allclose(out, ref, atol=1e-6), "one-hot path mismatch vs gather"

    # Path B (large-vocab DMA-gather path) — exercised explicitly so the
    # scalar-prefetch + manual-DMA code is verified on the same data.
    out_g = jax.block_until_ready(
        embedding_lookup(x, layer.weight, force_gather=True))
    assert out_g.shape == (2, 8, n_d), out_g.shape
    assert jnp.allclose(out_g, ref, atol=1e-6), "DMA-gather path mismatch"

    print("KERNEL_OK")
</pallas_src>

<mosaic_0001>
module attributes {stable_mosaic.version = 11 : i64} {
  func.func @_onehot_kernel(%arg0: i32, %arg1: memref<16x1xi32, #tpu.memory_space<vmem>>, %arg2: memref<16x32xf32, #tpu.memory_space<vmem>>, %arg3: memref<16x32xf32, #tpu.memory_space<vmem>>) attributes {dimension_semantics = [#tpu.dimension_semantics<parallel>], iteration_bounds = array<i64: 1>, scalar_prefetch = 0 : i64, scratch_operands = 0 : i64, tpu.core_type = #tpu.core_type<tc>, window_params = [{transform_indices = @transform_0, window_bounds = array<i64: 16, 1>}, {pipeline_mode = #tpu.pipeline_mode<synchronous>, transform_indices = @transform_1, window_bounds = array<i64: 16, 32>}, {transform_indices = @transform_2, window_bounds = array<i64: 16, 32>}]} {
    %c0 = arith.constant 0 : index
    %c0_0 = arith.constant 0 : index
    %0 = vector.load %arg1[%c0, %c0_0] : memref<16x1xi32, #tpu.memory_space<vmem>>, vector<16x1xi32>
    %1 = tpu.iota {dimensions = array<i32: 1>} : vector<16x16xi32>
    %2 = vector.broadcast %0 : vector<16x1xi32> to vector<16x16xi32>
    %3 = arith.cmpi eq, %2, %1 : vector<16x16xi32>
    %4 = arith.extui %3 : vector<16x16xi1> to vector<16x16xi32>
    %5 = arith.sitofp %4 : vector<16x16xi32> to vector<16x16xf32>
    %c0_1 = arith.constant 0 : index
    %c0_2 = arith.constant 0 : index
    %6 = vector.load %arg2[%c0_1, %c0_2] : memref<16x32xf32, #tpu.memory_space<vmem>>, vector<16x32xf32>
    %cst = arith.constant dense<0.000000e+00> : vector<16x32xf32>
    %7 = tpu.matmul %5, %6, %cst {dimension_numbers = #tpu.dot_dimension_numbers<[1], [0], [0], [1], [0, 0, 1, 1], [], []>} : vector<16x16xf32>, vector<16x32xf32>, vector<16x32xf32> -> vector<16x32xf32>
    %c0_3 = arith.constant 0 : index
    %c0_4 = arith.constant 0 : index
    %8 = vector.load %arg3[%c0_3, %c0_4] : memref<16x32xf32, #tpu.memory_space<vmem>>, vector<16x32xf32>
    tpu.vector_store %arg3[%c0_3, %c0_4], %7 {strides = array<i32>} : memref<16x32xf32, #tpu.memory_space<vmem>>, vector<16x32xf32>,
    return
  }
  func.func @transform_0(%arg0: i32) -> (i32, i32) {
    %c0_i32 = arith.constant 0 : i32
    %c0_i32_0 = arith.constant 0 : i32
    return %arg0, %c0_i32 : i32, i32
  }
  func.func @transform_1(%arg0: i32) -> (i32, i32) {
    %c0_i32 = arith.constant 0 : i32
    %c0_i32_0 = arith.constant 0 : i32
    %c0_i32_1 = arith.constant 0 : i32
    return %c0_i32, %c0_i32_0 : i32, i32
  }
  func.func @transform_2(%arg0: i32) -> (i32, i32) {
    %c0_i32 = arith.constant 0 : i32
    %c0_i32_0 = arith.constant 0 : i32
    return %arg0, %c0_i32 : i32, i32
  }
}

</mosaic_0001>

<llo_original>
// kernel: embedding_lookup.1
$region0: #{embedding_lookup.1}
  #allocation0 [shape = 'u32[]', space=smem, size = 0x4, offset = 0x4, fixed_abs, tag = 'smem constant byte address 0x4 - core index']
  #allocation1 [shape = 'u32[144,128]{1,0:T(1,128)}', space=vmem, size = 0x12000, scoped, tag = 'internal scratch']
  %s0 = inlined_call_operand.vmem [shape: s32[16,1], index: 0, kind: input, shape index: {}]
  %s1 = inlined_call_operand.vmem [shape: f32[16,32], index: 1, kind: input, shape index: {}]
  %s2 = inlined_call_operand.hbm [shape: f32[16,32], index: 2, kind: output, shape index: {}]
  %s3 = sld [smem:[#allocation0]]
  $region18: #{embedding_lookup.1} parent=0
    _
  %s5 = ssub.s32 1, %s3
  %s6 = scalar_select 0, %s5, %s3
  $region1: #{embedding_lookup.1} parent=0
    #allocation2 [shape = 'u8[8192]{0}', space=vmem, size = 0x2000, scoped, tag = 'output window, operand 0, single buffered']
    #allocation3 [shape = 's32[1]{0}', space=sflag, size = 0x4, scoped, tag = 'scoped memory for embedding_lookup.1']
    %7 = vsyncpa [#allocation3], 0
    // Predicated region
    $region2: #{embedding_lookup.1} parent=1 // pred_check
      _
    $region3: #{embedding_lookup.1} parent=1 // pred_check_branch
      %9 = sbr.rel (0) target = $region5
    $region4: #{embedding_lookup.1} parent=1 // pred_region
      _
    $region5: #{embedding_lookup.1} parent=1 // pred_fallthru
      _
    // Predicated region
    $region6: #{embedding_lookup.1} parent=1 // pred_check
      _
    $region7: #{embedding_lookup.1} parent=1 // pred_check_branch
      %11 = sbr.rel (0) target = $region9
    $region8: #{embedding_lookup.1} parent=1 // pred_region
      _
    $region9: #{embedding_lookup.1} parent=1 // pred_fallthru
      _
    %v12 = vld [vmem:[%s0] sm:$0xff]
    %v13 = vld [vmem:[%s0 + $0x8] sm:$0xff]
    %v14 = vlaneseq
    %v15 = vand.u32 %v14, 127
    %16 = vset.pattern.permute.xlu0 0
    %17 = vperm.xlu0 %16, %v12
    %v18 = vpop.permute.xlu0 %17
    %19 = vset.pattern.permute.xlu0 0
    %20 = vperm.xlu0 %19, %v13
    %v21 = vpop.permute.xlu0 %20
    %vm22 = vcmp.eq.s32.totalorder %v18, %v15
    %vm23 = vcmp.eq.s32.totalorder %v21, %v15
    %v24 = vsel %vm22, 1, 0
    %v25 = vsel %vm23, 1, 0
    %v26 = vcvt.s32.f32 %v24
    %v27 = vcvt.s32.f32 %v25
    %v28 = vld [vmem:[%s1] sm:$0xff]
    %v29 = vld [vmem:[%s1 + $0x8] sm:$0xff]
    %vm30 = vcmask 130048
    %v32 = vsel %vm30, %v26, 0
    %v35 = vsel %vm30, %v27, 0
    %37 = vmatprep.subr.mxu0 0.0
    %38 = vmatpush1.msra.mxu0 0.0
    %39 = vmatprep.subr.mxu0 0.0
    %40 = vmatpush1.msra.mxu0 0.0
    %41 = vmatprep.subr.mxu0 0.0
    %42 = vmatpush1.msra.mxu0 0.0
    %43 = vmatprep.subr.mxu0 0.0
    %44 = vmatpush1.msra.mxu0 0.0
    %45 = vmatprep.subr.mxu0 0.0
    %46 = vmatpush1.msra.mxu0 0.0
    %47 = vmatprep.subr.mxu0 0.0
    %48 = vmatpush1.msra.mxu0 0.0
    %49 = vmatprep.subr.mxu0 0.0
    %50 = vmatpush1.msra.mxu0 0.0
    %51 = vmatprep.subr.mxu0 0.0
    %52 = vmatpush1.msra.mxu0 0.0
    %53 = vmatprep.subr.mxu0 0.0
    %54 = vmatpush1.msra.mxu0 0.0
    %55 = vmatprep.subr.mxu0 0.0
    %56 = vmatpush1.msra.mxu0 0.0
    %57 = vmatprep.subr.mxu0 0.0
    %58 = vmatpush1.msra.mxu0 0.0
    %59 = vmatprep.subr.mxu0 0.0
    %60 = vmatpush1.msra.mxu0 0.0
    %61 = vmatprep.subr.mxu0 0.0
    %62 = vmatpush1.msra.mxu0 0.0
    %63 = vmatprep.subr.mxu0 0.0
    %64 = vmatpush1.msra.mxu0 0.0
    %65 = vmatprep.subr.mxu0 0.0
    %66 = vmatpush1.msra.mxu0 %v29
    %67 = vmatprep.subr.mxu0 0.0
    %68 = vmatpush1.msra.mxu0 %v28
    %69 = vmatprep.subr.mxu0 0.0
    %70 = vmatpush2.msra.mxu0 0.0
    %71 = vmatprep.subr.mxu0 0.0
    %72 = vmatpush2.msra.mxu0 0.0
    %73 = vmatprep.subr.mxu0 0.0
    %74 = vmatpush2.msra.mxu0 0.0
    %75 = vmatprep.subr.mxu0 0.0
    %76 = vmatpush2.msra.mxu0 0.0
    %77 = vmatprep.subr.mxu0 0.0
    %78 = vmatpush2.msra.mxu0 0.0
    %79 = vmatprep.subr.mxu0 0.0
    %80 = vmatpush2.msra.mxu0 0.0
    %81 = vmatprep.subr.mxu0 0.0
    %82 = vmatpush2.msra.mxu0 0.0
    %83 = vmatprep.subr.mxu0 0.0
    %84 = vmatpush2.msra.mxu0 0.0
    %85 = vmatprep.subr.mxu0 0.0
    %86 = vmatpush2.msra.mxu0 0.0
    %87 = vmatprep.subr.mxu0 0.0
    %88 = vmatpush2.msra.mxu0 0.0
    %89 = vmatprep.subr.mxu0 0.0
    %90 = vmatpush2.msra.mxu0 0.0
    %91 = vmatprep.subr.mxu0 0.0
    %92 = vmatpush2.msra.mxu0 0.0
    %93 = vmatprep.subr.mxu0 0.0
    %94 = vmatpush2.msra.mxu0 0.0
    %95 = vmatprep.subr.mxu0 0.0
    %96 = vmatpush2.msra.mxu0 0.0
    %97 = vmatprep.subr.mxu0 0.0
    %98 = vmatpush2.msra.mxu0 0.0
    %99 = vmatprep.subr.mxu0 0.0
    %100 = vmatpush2.msra.mxu0 0.0
    %101 = vmatprep.mubr.f32.mxu0 0.0
    %102 = vmatmul.mubr.f32.gmra.mxu0 %v32
    %v103 = vpop.f32.mrf.mxu0
    %v104 = vadd.f32 0.0, %v103
    %v105 = vpop.f32.mrf.mxu0
    %106 = vmatprep.mubr.f32.mxu0 0.0
    %107 = vmatmul.mubr.f32.gmra.mxu0 %v35
    %v108 = vpop.f32.mrf.mxu0
    %v109 = vadd.f32 0.0, %v108
    %v110 = vpop.f32.mrf.mxu0
    %111 = vdwg.mxu0
    %vm112 = vcmask 261120
    %113 = vst.msk [vmem:[#allocation2] sm:$0xff] %vm112, %v104
    %114 = vst.msk [vmem:[#allocation2 + $0x8] sm:$0xff] %vm112, %v109
    // Predicated region
    $region10: #{embedding_lookup.1} parent=1 // pred_check
      _
    $region11: #{embedding_lookup.1} parent=1 // pred_check_branch
      %116 = sbr.rel (0) target = $region13
    $region12: #{embedding_lookup.1} parent=1 // pred_region
      %s118 = ssub.s32 256, 256
      %119 = vsyncadd [#allocation3], %s118
      %s120 = sshll.u32 [#allocation2], 4
      %s121 = int_to_ptr.vmem [resolvable:$true] %s120
      %126 = dma.vmem_to_hbm [thread:$0]  %s121, 256, %s2, [#allocation3], 128, 128, 8
    $region13: #{embedding_lookup.1} parent=1 // pred_fallthru
      _
    // Predicated region
    $region14: #{embedding_lookup.1} parent=1 // pred_check
      _
    $region15: #{embedding_lookup.1} parent=1 // pred_check_branch
      %128 = sbr.rel (0) target = $region17
    $region16: #{embedding_lookup.1} parent=1 // pred_region
      %129 = dma.done [#allocation3], 256
    $region17: #{embedding_lookup.1} parent=1 // pred_fallthru
      _
    %130 = vsyncpa [#allocation3], 1

</llo_original>
